<compile_context>
chip_gen: v6e
topology: v6e:2x2x1
jax: 0.10.0
libtpu: 0.0.40
codegen_flags: <defaults>
</compile_context>

<pallas_src>
import jax
import jax.numpy as jnp
from jax.experimental import pallas as pl
from jax.experimental.pallas import tpu as pltpu


_VMEM_BLOCK_BUDGET = 20 * 1024 * 1024   # target bytes for resident (double-buffered) I/O blocks
_VMEM_LIMIT_BYTES = 32 * 1024 * 1024    # explicit scoped-VMEM limit; safe on v5e/v6e (128 MiB) and v7x (64 MiB)


def _round_up(a, b):
    return ((a + b - 1) // b) * b


# ----------------------------------------------------------------------------- #
# Single-pass fused kernel: Nb batch items per grid step.
# ----------------------------------------------------------------------------- #
def _ca_fused_kernel(x_ref, w1t_ref, w2t_ref, o_ref):
    # x_ref: (Nb, C, HWp) native dtype; w1t_ref: (C, C_red) f32; w2t_ref: (C_red, C) f32
    x = x_ref[...]                                         # no full-tile upcast
    y = jnp.max(x, axis=-1).astype(jnp.float32)            # (Nb, C) pooled, tiny
    h = jnp.maximum(
        jnp.dot(y, w1t_ref[...], preferred_element_type=jnp.float32), 0.0)   # (Nb, C_red)
    z = jax.nn.sigmoid(
        jnp.dot(h, w2t_ref[...], preferred_element_type=jnp.float32))        # (Nb, C)
    o_ref[...] = x * z[:, :, None].astype(x.dtype)         # broadcast over lanes


def _single_pass(x, w1t, w2t, budget, vmem_limit):
    N, C, HWp = x.shape
    C_red = w1t.shape[1]
    item_bytes = C * HWp * x.dtype.itemsize

    max_nb = max(1, budget // (4 * item_bytes))            # in+out, double-buffered
    Nb = min(N, max_nb)
    if N >= 2:
        # Keep >= 2 grid steps so both v7x TensorCores get work; Nb still grows
        # with N (amortizes per-step overhead for realistic batch sizes).
        Nb = min(Nb, pl.cdiv(N, 2))
    Np = pl.cdiv(N, Nb) * Nb
    if Np != N:
        x = jnp.pad(x, ((0, Np - N), (0, 0), (0, 0)))      # padded items sliced off later

    out = pl.pallas_call(
        _ca_fused_kernel,
        out_shape=jax.ShapeDtypeStruct((Np, C, HWp), x.dtype),
        grid_spec=pltpu.PrefetchScalarGridSpec(
            num_scalar_prefetch=0,
            grid=(Np // Nb,),
            in_specs=[
                pl.BlockSpec((Nb, C, HWp), lambda i: (i, 0, 0)),
                pl.BlockSpec((C, C_red), lambda i: (0, 0)),
                pl.BlockSpec((C_red, C), lambda i: (0, 0)),
            ],
            out_specs=pl.BlockSpec((Nb, C, HWp), lambda i: (i, 0, 0)),
        ),
        compiler_params=pltpu.CompilerParams(
            dimension_semantics=("parallel",),
            vmem_limit_bytes=vmem_limit,
        ),
    )(x, w1t, w2t)
    return out


# ----------------------------------------------------------------------------- #
# Two-pass HW-tiled fallback (large C*HW slabs that don't fit the VMEM budget).
# ----------------------------------------------------------------------------- #
def _pool_kernel(x_ref, y_ref):
    # x_ref: (C, T); y_ref: (C, 1) resident accumulator across the HW-tile axis.
    m = jnp.max(x_ref[...], axis=-1, keepdims=True)        # (C, 1) native dtype

    @pl.when(pl.program_id(1) == 0)
    def _():
        y_ref[...] = m

    @pl.when(pl.program_id(1) != 0)
    def _():
        y_ref[...] = jnp.maximum(y_ref[...], m)


def _scale_kernel(y_ref, w1_ref, w2_ref, x_ref, o_ref):
    # y_ref: (C, 1); w1_ref: (C_red, C) f32; w2_ref: (C, C_red) f32; x/o: (C, T)
    y = y_ref[...].astype(jnp.float32)
    h = jnp.maximum(
        jnp.dot(w1_ref[...], y, preferred_element_type=jnp.float32), 0.0)    # (C_red, 1)
    z = jax.nn.sigmoid(
        jnp.dot(w2_ref[...], h, preferred_element_type=jnp.float32))         # (C, 1)
    x = x_ref[...]
    o_ref[...] = x * z.astype(x.dtype)                     # broadcast over lanes


def _two_pass(x, w1f, w2f, T, vmem_limit):
    N, C, HWp = x.shape
    C_red = w1f.shape[0]
    nt = HWp // T

    pooled = pl.pallas_call(
        _pool_kernel,
        out_shape=jax.ShapeDtypeStruct((N, C, 1), x.dtype),
        grid_spec=pltpu.PrefetchScalarGridSpec(
            num_scalar_prefetch=0,
            grid=(N, nt),
            in_specs=[
                pl.BlockSpec((pl.Squeezed(), C, T), lambda n, t: (n, 0, t)),
            ],
            out_specs=pl.BlockSpec((pl.Squeezed(), C, 1), lambda n, t: (n, 0, 0)),
        ),
        compiler_params=pltpu.CompilerParams(
            dimension_semantics=("parallel", "arbitrary"),
            vmem_limit_bytes=vmem_limit,
        ),
    )(x)

    out = pl.pallas_call(
        _scale_kernel,
        out_shape=jax.ShapeDtypeStruct((N, C, HWp), x.dtype),
        grid_spec=pltpu.PrefetchScalarGridSpec(
            num_scalar_prefetch=0,
            grid=(N, nt),
            in_specs=[
                pl.BlockSpec((pl.Squeezed(), C, 1), lambda n, t: (n, 0, 0)),
                pl.BlockSpec((C_red, C), lambda n, t: (0, 0)),
                pl.BlockSpec((C, C_red), lambda n, t: (0, 0)),
                pl.BlockSpec((pl.Squeezed(), C, T), lambda n, t: (n, 0, t)),
            ],
            out_specs=pl.BlockSpec((pl.Squeezed(), C, T), lambda n, t: (n, 0, t)),
        ),
        compiler_params=pltpu.CompilerParams(
            dimension_semantics=("parallel", "parallel"),
            vmem_limit_bytes=vmem_limit,
        ),
    )(pooled, w1f, w2f, x)
    return out


# ----------------------------------------------------------------------------- #
# Wrapper
# ----------------------------------------------------------------------------- #
def channel_attention(x_nchw, w1, w2, *, block_budget_bytes=_VMEM_BLOCK_BUDGET):
    """x_nchw: (N, C, H, W); w1: (C//r, C); w2: (C, C//r). Returns (N, C, H, W)."""
    N, C, H, W = x_nchw.shape
    HW = H * W
    dtype = x_nchw.dtype
    isize = jnp.dtype(dtype).itemsize

    HW128 = _round_up(HW, 128)
    item_bytes = C * HW128 * isize
    single = 4 * item_bytes <= block_budget_bytes

    if single:
        HWp = HW128
    else:
        # HW-tile size: lane-dense multiple of 128 sized so 2x(in)+2x(out) fit budget.
        T = max(128, (block_budget_bytes // (4 * C * isize)) // 128 * 128)
        HWp = _round_up(HW, T)

    x = x_nchw.reshape(N, C, HW)
    if HWp != HW:
        # Pad the lane axis with dtype-min so the global max-pool is unaffected;
        # padded columns (and padded batch rows) are sliced off before returning.
        pad_val = jnp.finfo(dtype).min
        x = jnp.pad(x, ((0, 0), (0, 0), (0, HWp - HW)), constant_values=pad_val)

    if single:
        w1t = jnp.asarray(w1, jnp.float32).T          # (C, C_red), pre-cast once
        w2t = jnp.asarray(w2, jnp.float32).T          # (C_red, C)
        out = _single_pass(x, w1t, w2t, block_budget_bytes, _VMEM_LIMIT_BYTES)
    else:
        w1f = jnp.asarray(w1, jnp.float32)            # (C_red, C)
        w2f = jnp.asarray(w2, jnp.float32)            # (C, C_red)
        out = _two_pass(x, w1f, w2f, T, _VMEM_LIMIT_BYTES)

    return out[:N, :, :HW].reshape(N, C, H, W)


def channel_attention_ref(x, w1, w2):
    """Pure-JAX reference matching the PyTorch module."""
    y = jnp.max(x, axis=(2, 3), keepdims=True)                       # (N,C,1,1)
    y = jnp.einsum('oc,nchw->nohw', w1, y)                           # 1x1 conv
    y = jnp.maximum(y, 0.0)
    y = jnp.einsum('oc,nchw->nohw', w2, y)                           # 1x1 conv
    y = jax.nn.sigmoid(y)
    return x * y


if __name__ == "__main__":
    # Shapes consistent with the module: planes=32, reduction=8 -> hidden=4.
    N, C, H, W = 2, 32, 16, 16
    reduction = 8
    C_red = C // reduction

    key = jax.random.PRNGKey(0)
    kx, k1, k2, kx2 = jax.random.split(key, 4)

    x = jax.random.normal(kx, (N, C, H, W), dtype=jnp.float32)
    w1 = jax.random.normal(k1, (C_red, C), dtype=jnp.float32) * (1.0 / C) ** 0.5
    w2 = jax.random.normal(k2, (C, C_red), dtype=jnp.float32) * (1.0 / C_red) ** 0.5

    # Main (single-pass) path.
    out = jax.block_until_ready(channel_attention(x, w1, w2))
    ref = channel_attention_ref(x, w1, w2)
    assert out.shape == (N, C, H, W)
    assert jnp.allclose(out, ref, atol=1e-5, rtol=1e-5), "mismatch vs reference"

    # Non-multiple-of-128 spatial size (exercises the lane-axis padding).
    x_odd = jax.random.normal(kx2, (N, C, 15, 15), dtype=jnp.float32)
    out_odd = jax.block_until_ready(channel_attention(x_odd, w1, w2))
    assert jnp.allclose(out_odd, channel_attention_ref(x_odd, w1, w2),
                        atol=1e-5, rtol=1e-5), "mismatch vs reference (padded HW)"

    # Force the HW-tiled two-pass fallback (large-slab / v7x VMEM plan) and verify.
    out_2p = jax.block_until_ready(channel_attention(x, w1, w2, block_budget_bytes=1))
    assert jnp.allclose(out_2p, ref, atol=1e-5, rtol=1e-5), "mismatch vs reference (two-pass)"

    print("KERNEL_OK")
</pallas_src>

<mosaic_0001>
module attributes {stable_mosaic.version = 11 : i64} {
  func.func @_ca_fused_kernel(%arg0: i32, %arg1: memref<1x32x256xf32, #tpu.memory_space<vmem>>, %arg2: memref<32x4xf32, #tpu.memory_space<vmem>>, %arg3: memref<4x32xf32, #tpu.memory_space<vmem>>, %arg4: memref<1x32x256xf32, #tpu.memory_space<vmem>>) attributes {dimension_semantics = [#tpu.dimension_semantics<parallel>], iteration_bounds = array<i64: 2>, scalar_prefetch = 0 : i64, scratch_operands = 0 : i64, tpu.core_type = #tpu.core_type<tc>, window_params = [{transform_indices = @transform_0, window_bounds = array<i64: 1, 32, 256>}, {pipeline_mode = #tpu.pipeline_mode<synchronous>, transform_indices = @transform_1, window_bounds = array<i64: 32, 4>}, {pipeline_mode = #tpu.pipeline_mode<synchronous>, transform_indices = @transform_2, window_bounds = array<i64: 4, 32>}, {transform_indices = @transform_3, window_bounds = array<i64: 1, 32, 256>}]} {
    %c0 = arith.constant 0 : index
    %c0_0 = arith.constant 0 : index
    %c0_1 = arith.constant 0 : index
    %0 = vector.load %arg1[%c0, %c0_0, %c0_1] : memref<1x32x256xf32, #tpu.memory_space<vmem>>, vector<1x32x256xf32>
    %cst = arith.constant dense<0xFF800000> : vector<1x32xf32>
    %1 = vector.multi_reduction <maximumf>, %0, %cst [2] : vector<1x32x256xf32> to vector<1x32xf32>
    %c0_2 = arith.constant 0 : index
    %c0_3 = arith.constant 0 : index
    %2 = vector.load %arg2[%c0_2, %c0_3] : memref<32x4xf32, #tpu.memory_space<vmem>>, vector<32x4xf32>
    %cst_4 = arith.constant dense<0.000000e+00> : vector<1x4xf32>
    %3 = tpu.matmul %1, %2, %cst_4 {dimension_numbers = #tpu.dot_dimension_numbers<[1], [0], [0], [1], [0, 0, 1, 1], [], []>} : vector<1x32xf32>, vector<32x4xf32>, vector<1x4xf32> -> vector<1x4xf32>
    %cst_5 = arith.constant 0.000000e+00 : f32
    %4 = vector.broadcast %cst_5 : f32 to vector<1x4xf32>
    %5 = arith.maximumf %3, %4 : vector<1x4xf32>
    %c0_6 = arith.constant 0 : index
    %c0_7 = arith.constant 0 : index
    %6 = vector.load %arg3[%c0_6, %c0_7] : memref<4x32xf32, #tpu.memory_space<vmem>>, vector<4x32xf32>
    %cst_8 = arith.constant dense<0.000000e+00> : vector<1x32xf32>
    %7 = tpu.matmul %5, %6, %cst_8 {dimension_numbers = #tpu.dot_dimension_numbers<[1], [0], [0], [1], [0, 0, 1, 1], [], []>} : vector<1x4xf32>, vector<4x32xf32>, vector<1x32xf32> -> vector<1x32xf32>
    %8 = arith.negf %7 : vector<1x32xf32>
    %9 = math.exp %8 : vector<1x32xf32>
    %cst_9 = arith.constant 1.000000e+00 : f32
    %10 = vector.broadcast %cst_9 : f32 to vector<1x32xf32>
    %11 = arith.addf %10, %9 : vector<1x32xf32>
    %12 = arith.divf %10, %11 : vector<1x32xf32>
    %13 = vector.shape_cast %12 : vector<1x32xf32> to vector<1x32x1xf32>
    %14 = vector.broadcast %13 : vector<1x32x1xf32> to vector<1x32x256xf32>
    %15 = arith.mulf %0, %14 : vector<1x32x256xf32>
    %c0_10 = arith.constant 0 : index
    %c0_11 = arith.constant 0 : index
    %c0_12 = arith.constant 0 : index
    %16 = vector.load %arg4[%c0_10, %c0_11, %c0_12] : memref<1x32x256xf32, #tpu.memory_space<vmem>>, vector<1x32x256xf32>
    tpu.vector_store %arg4[%c0_10, %c0_11, %c0_12], %15 {strides = array<i32>} : memref<1x32x256xf32, #tpu.memory_space<vmem>>, vector<1x32x256xf32>,
    return
  }
  func.func @transform_0(%arg0: i32) -> (i32, i32, i32) {
    %c0_i32 = arith.constant 0 : i32
    %c0_i32_0 = arith.constant 0 : i32
    %c0_i32_1 = arith.constant 0 : i32
    return %arg0, %c0_i32, %c0_i32_0 : i32, i32, i32
  }
  func.func @transform_1(%arg0: i32) -> (i32, i32) {
    %c0_i32 = arith.constant 0 : i32
    %c0_i32_0 = arith.constant 0 : i32
    %c0_i32_1 = arith.constant 0 : i32
    return %c0_i32, %c0_i32_0 : i32, i32
  }
  func.func @transform_2(%arg0: i32) -> (i32, i32) {
    %c0_i32 = arith.constant 0 : i32
    %c0_i32_0 = arith.constant 0 : i32
    %c0_i32_1 = arith.constant 0 : i32
    return %c0_i32, %c0_i32_0 : i32, i32
  }
  func.func @transform_3(%arg0: i32) -> (i32, i32, i32) {
    %c0_i32 = arith.constant 0 : i32
    %c0_i32_0 = arith.constant 0 : i32
    %c0_i32_1 = arith.constant 0 : i32
    return %arg0, %c0_i32, %c0_i32_0 : i32, i32, i32
  }
}

</mosaic_0001>

<llo_original>
// kernel: tpu_custom_call.1
$region0: #{tpu_custom_call.1}
  #allocation0 [shape = 'u32[]', space=smem, size = 0x4, offset = 0x4, fixed_abs, tag = 'smem constant byte address 0x4 - core index']
  #allocation1 [shape = 'u32[144,128]{1,0:T(1,128)}', space=vmem, size = 0x12000, scoped, tag = 'internal scratch']
  %s0 = inlined_call_operand.hbm [shape: f32[2,32,256], index: 0, kind: input, shape index: {}]
  %s1 = inlined_call_operand.vmem [shape: f32[32,4], index: 1, kind: input, shape index: {}]
  %s2 = inlined_call_operand.vmem [shape: f32[4,32], index: 2, kind: input, shape index: {}]
  %s3 = inlined_call_operand.hbm [shape: f32[2,32,256], index: 3, kind: output, shape index: {}]
  %s4 = sld [smem:[#allocation0]]
  $region49: #{tpu_custom_call.1} parent=0
    _
  %s6 = ssub.s32 1, %s4
  %s7 = scalar_select 0, %s6, %s4
  $region1: #{tpu_custom_call.1} parent=0
    #allocation2 [shape = 'u8[65536]{0}', space=vmem, size = 0x10000, scoped, tag = 'input window, operand 0']
    #allocation3 [shape = 's32[2]{0}', space=sflag, size = 0x8, scoped, tag = 'scoped memory for tpu_custom_call.1']
    #allocation4 [shape = 's32[2]{0}', space=sflag, size = 0x8, scoped, tag = 'scoped memory for tpu_custom_call.1']
    #allocation5 [shape = 'u8[65536]{0}', space=vmem, size = 0x10000, scoped, tag = 'output window, operand 0']
    %8 = vsyncpa [#allocation3], 0
    %s9 = scalar_lea.sflag [#allocation3], 1
    %10 = vsyncpa %s9, 0
    %11 = vsyncpa [#allocation4], 0
    %s12 = scalar_lea.sflag [#allocation4], 1
    %13 = vsyncpa %s12, 0
    loop: start=0, step=1, limit=4
    $region2: #{tpu_custom_call.1} parent=1 // loop_pre_header
      _
    $region3: #{tpu_custom_call.1} parent=1 // loop_header
      %s15 = sphi 0, %s19
      %p16 = scmp.ge.s32.totalorder %s15, 4
      %s25 = sphi 0, %s27
      %s28 = sphi 0, %s25
      %s29 = sphi 0, %s28
      %s45 = sphi 0, %s29
      %s49 = sphi 0, %s49
      %s51 = sphi 0, %s49
      %s52 = sphi 0, %s51
      %s66 = sphi 0, %s52
      %s70 = sphi 0, %s70
      %s72 = sphi 0, %s70
      %s73 = sphi 0, %s72
      %s87 = sphi 0, %s73
      %s93 = sphi 0, %s95
      %s96 = sphi 0, %s93
      %s97 = sphi 0, %s96
      %s113 = sphi 0, %s97
    $region4: #{tpu_custom_call.1} parent=1 // loop_header_branch
      %18 = sbr.rel (%p16) target = $region8
    $region5: #{tpu_custom_call.1} parent=1 // loop_body
      %s20 = ssub.s32 %s15, 1
      %s21 = ssub.s32 %s15, 2
      %s22 = sadd.s32 %s15, 1
      %s23 = ssub.s32 %s15, %s22
      %p24 = scmp.eq.s32.totalorder %s23, 0
      %s26 = sadd.s32 %s25, 1
      %s27 = scalar_select %p24, %s25, %s26
      %p30 = pneg %p24
      %p31 = scmp.eq.s32.totalorder %s15, 1
      %p32 = por %p30, %p31
      %p33 = scmp.ne.s32.totalorder %s25, %s28
      %p34 = scmp.eq.s32.totalorder %s15, 0
      %p35 = por %p33, %p34
      %p36 = scmp.ne.s32.totalorder %s25, %s28
      %p37 = scmp.eq.s32.totalorder %s20, 1
      %p38 = por %p36, %p37
      %p39 = scmp.ne.s32.totalorder %s28, %s29
      %p40 = scmp.eq.s32.totalorder %s20, 0
      %p41 = por %p39, %p40
      %p42 = scmp.ne.s32.totalorder %s28, %s29
      %p43 = scmp.eq.s32.totalorder %s21, 1
      %p44 = por %p42, %p43
      %p46 = scmp.ne.s32.totalorder %s29, %s45
      %p47 = scmp.eq.s32.totalorder %s21, 0
      %p48 = por %p46, %p47
      %s50 = sadd.s32 %s49, 1
      %p53 = scmp.eq.s32.totalorder %s15, 1
      %p54 = scmp.ne.s32.totalorder %s49, %s51
      %p55 = scmp.eq.s32.totalorder %s15, 0
      %p56 = por %p54, %p55
      %p57 = scmp.ne.s32.totalorder %s49, %s51
      %p58 = scmp.eq.s32.totalorder %s20, 1
      %p59 = por %p57, %p58
      %p60 = scmp.ne.s32.totalorder %s51, %s52
      %p61 = scmp.eq.s32.totalorder %s20, 0
      %p62 = por %p60, %p61
      %p63 = scmp.ne.s32.totalorder %s51, %s52
      %p64 = scmp.eq.s32.totalorder %s21, 1
      %p65 = por %p63, %p64
      %p67 = scmp.ne.s32.totalorder %s52, %s66
      %p68 = scmp.eq.s32.totalorder %s21, 0
      %p69 = por %p67, %p68
      %s71 = sadd.s32 %s70, 1
      %p74 = scmp.eq.s32.totalorder %s15, 1
      %p75 = scmp.ne.s32.totalorder %s70, %s72
      %p76 = scmp.eq.s32.totalorder %s15, 0
      %p77 = por %p75, %p76
      %p78 = scmp.ne.s32.totalorder %s70, %s72
      %p79 = scmp.eq.s32.totalorder %s20, 1
      %p80 = por %p78, %p79
      %p81 = scmp.ne.s32.totalorder %s72, %s73
      %p82 = scmp.eq.s32.totalorder %s20, 0
      %p83 = por %p81, %p82
      %p84 = scmp.ne.s32.totalorder %s72, %s73
      %p85 = scmp.eq.s32.totalorder %s21, 1
      %p86 = por %p84, %p85
      %p88 = scmp.ne.s32.totalorder %s73, %s87
      %p89 = scmp.eq.s32.totalorder %s21, 0
      %p90 = por %p88, %p89
      %s91 = ssub.s32 %s15, %s22
      %p92 = scmp.eq.s32.totalorder %s91, 0
      %s94 = sadd.s32 %s93, 1
      %s95 = scalar_select %p92, %s93, %s94
      %p98 = pneg %p92
      %p99 = scmp.eq.s32.totalorder %s15, 1
      %p100 = por %p98, %p99
      %p101 = scmp.ne.s32.totalorder %s93, %s96
      %p102 = scmp.eq.s32.totalorder %s15, 0
      %p103 = por %p101, %p102
      %p104 = scmp.ne.s32.totalorder %s93, %s96
      %p105 = scmp.eq.s32.totalorder %s20, 1
      %p106 = por %p104, %p105
      %p107 = scmp.ne.s32.totalorder %s96, %s97
      %p108 = scmp.eq.s32.totalorder %s20, 0
      %p109 = por %p107, %p108
      %p110 = scmp.ne.s32.totalorder %s96, %s97
      %p111 = scmp.eq.s32.totalorder %s21, 1
      %p112 = por %p110, %p111
      %p114 = scmp.ne.s32.totalorder %s97, %s113
      %p115 = scmp.eq.s32.totalorder %s21, 0
      %p116 = por %p114, %p115
      %p117 = scmp.le.s32.totalorder 1, %s15
      %p118 = scmp.lt.s32.totalorder %s15, 3
      %p119 = pnand %p117, %p118
      %p120 = pneg %p119
      // Predicated region
      $region9: #{tpu_custom_call.1} parent=5 // pred_check
        _
      $region10: #{tpu_custom_call.1} parent=5 // pred_check_branch
        %122 = sbr.rel (%p119) target = $region12
      $region11: #{tpu_custom_call.1} parent=5 // pred_region
        %s123 = ssub.s32 %s15, 1
        // Predicated region
        $region13: #{tpu_custom_call.1} parent=11 // pred_check
          %p124 = pneg %p62
        $region14: #{tpu_custom_call.1} parent=11 // pred_check_branch
          %126 = sbr.rel (%p124) target = $region16
        $region15: #{tpu_custom_call.1} parent=11 // pred_region
          _
        $region16: #{tpu_custom_call.1} parent=11 // pred_fallthru
          _
        // Predicated region
        $region17: #{tpu_custom_call.1} parent=11 // pred_check
          %p127 = pneg %p83
        $region18: #{tpu_custom_call.1} parent=11 // pred_check_branch
          %129 = sbr.rel (%p127) target = $region20
        $region19: #{tpu_custom_call.1} parent=11 // pred_region
          _
        $region20: #{tpu_custom_call.1} parent=11 // pred_fallthru
          _
      $region12: #{tpu_custom_call.1} parent=5 // pred_fallthru
        _
      %p130 = scmp.lt.s32.totalorder %s15, 2
      // Predicated region
      $region21: #{tpu_custom_call.1} parent=5 // pred_check
        %p131 = pneg %p130
      $region22: #{tpu_custom_call.1} parent=5 // pred_check_branch
        %133 = sbr.rel (%p131) target = $region24
      $region23: #{tpu_custom_call.1} parent=5 // pred_region
        // Predicated region
        $region25: #{tpu_custom_call.1} parent=23 // pred_check
          %p134 = pneg %p35
        $region26: #{tpu_custom_call.1} parent=23 // pred_check_branch
          %136 = sbr.rel (%p134) target = $region28
        $region27: #{tpu_custom_call.1} parent=23 // pred_region
          %s137 = sand.u32 %s25, 1
          %s138 = scalar_lea.sflag [#allocation3], %s137
          %s139 = sand.u32 %s25, 1
          %s140 = smul.addr %s139, 64
          %s141 = scalar_lea.vmem [#allocation2], %s140
          %s143 = ssub.s32 1024, 1024
          %144 = vsyncadd %s138, %s143
          %s145 = smul.addr %s15, 8
          %s146 = smul.addr %s145, 128
          %s147 = scalar_lea.hbm %s0, %s146
          %s148 = sshll.u32 %s141, 4
          %s149 = int_to_ptr.vmem [resolvable:$true] %s148
          %154 = dma.hbm_to_vmem [thread:$0]  %s147, 1024, %s149, %s138, 256, 256, 16
        $region28: #{tpu_custom_call.1} parent=23 // pred_fallthru
          _
      $region24: #{tpu_custom_call.1} parent=5 // pred_fallthru
        _
      %p155 = scmp.le.s32.totalorder 1, %s15
      %p156 = scmp.lt.s32.totalorder %s15, 3
      %p157 = pnand %p155, %p156
      %p158 = pneg %p157
      // Predicated region
      $region29: #{tpu_custom_call.1} parent=5 // pred_check
        _
      $region30: #{tpu_custom_call.1} parent=5 // pred_check_branch
        %160 = sbr.rel (%p157) target = $region32
      $region31: #{tpu_custom_call.1} parent=5 // pred_region
        %s161 = ssub.s32 %s15, 1
        %s162 = sand.u32 %s28, 1
        %s163 = scalar_lea.sflag [#allocation3], %s162
        %s164 = sand.u32 %s28, 1
        %s165 = smul.addr %s164, 64
        %s166 = scalar_lea.vmem [#allocation2], %s165
        // Predicated region
        $region33: #{tpu_custom_call.1} parent=31 // pred_check
          %p167 = pneg %p41
        $region34: #{tpu_custom_call.1} parent=31 // pred_check_branch
          %169 = sbr.rel (%p167) target = $region36
        $region35: #{tpu_custom_call.1} parent=31 // pred_region
          %170 = dma.done %s163, 1024
        $region36: #{tpu_custom_call.1} parent=31 // pred_fallthru
          _
        %s171 = sand.u32 %s28, 1
        %s172 = scalar_lea.sflag [#allocation3], %s171
        %s173 = sand.u32 %s28, 1
        %s174 = smul.addr %s173, 64
        %s175 = scalar_lea.vmem [#allocation2], %s174
        %p176 = pneg %p41
        %p177 = pneg %p38
        %p178 = pneg %p62
        %p179 = pneg %p59
        %p180 = pneg %p83
        %p181 = pneg %p80
        %p182 = pneg %p109
        %p183 = pneg %p106
        %s184 = sand.u32 %s96, 1
        %s185 = scalar_lea.sflag [#allocation4], %s184
        %s186 = sand.u32 %s96, 1
        %s187 = smul.addr %s186, 64
        %s188 = scalar_lea.vmem [#allocation5], %s187
        %v189 = vld [vmem:[%s166] sm:$0xff]
        %v190 = vld [vmem:[%s166 + $0x8] sm:$0xff]
        %v191 = vld [vmem:[%s166 + $0x10] sm:$0xff]
        %v192 = vld [vmem:[%s166 + $0x18] sm:$0xff]
        %v193 = vld [vmem:[%s166 + $0x20] sm:$0xff]
        %v194 = vld [vmem:[%s166 + $0x28] sm:$0xff]
        %v195 = vld [vmem:[%s166 + $0x30] sm:$0xff]
        %v196 = vld [vmem:[%s166 + $0x38] sm:$0xff]
        %v197 = vmax.f32 %v189, %v190
        %198 = vmax.xlane.f32.xlu0 %v197
        %v199 = vpop.xlane.xlu0 %198
        %v200 = vmax.f32 %v191, %v192
        %201 = vmax.xlane.f32.xlu0 %v200
        %v202 = vpop.xlane.xlu0 %201
        %v203 = vmax.f32 %v193, %v194
        %204 = vmax.xlane.f32.xlu0 %v203
        %v205 = vpop.xlane.xlu0 %204
        %v206 = vmax.f32 %v195, %v196
        %207 = vmax.xlane.f32.xlu0 %v206
        %v208 = vpop.xlane.xlu0 %207
        %v209 = vld [vmem:[%s1] sm:$0xff]
        %v210 = vld [vmem:[%s1 + $0x8] sm:$0xff]
        %v211 = vld [vmem:[%s1 + $0x10] sm:$0xff]
        %v212 = vld [vmem:[%s1 + $0x18] sm:$0xff]
        %v217 = vlaneseq
        %v218 = vand.u32 %v217, 127
        %v219 = vlaneseq
        %v220 = vshrl.u32 %v219, 7
        %v221 = vsub.s32 %v218, %v220
        %v222 = vrot.slane %v199, %v221
        %v223 = vadd.s32 %v218, 4294967288
        %v224 = vlaneseq
        %v225 = vshrl.u32 %v224, 7
        %v226 = vsub.s32 %v223, %v225
        %v227 = vrot.slane %v202, %v226
        %vm228 = vcmask 130112
        %v229 = vsel %vm228, %v227, %v222
        %v230 = vadd.s32 %v218, 4294967280
        %v231 = vlaneseq
        %v232 = vshrl.u32 %v231, 7
        %v233 = vsub.s32 %v230, %v232
        %v234 = vrot.slane %v205, %v233
        %vm235 = vcmask 195712
        %v236 = vsel %vm235, %v234, %v229
        %v237 = vadd.s32 %v218, 4294967272
        %v238 = vlaneseq
        %v239 = vshrl.u32 %v238, 7
        %v240 = vsub.s32 %v237, %v239
        %v241 = vrot.slane %v208, %v240
        %vm242 = vcmask 261312
        %v243 = vsel %vm242, %v241, %v236
        %vm244 = vcmask 261120
        %v245 = vsel %vm244, %v243, 0
        %247 = vmatprep.subr.mxu0 0.0
        %248 = vmatpush1.msra.mxu0 0.0
        %249 = vmatprep.subr.mxu0 0.0
        %250 = vmatpush1.msra.mxu0 0.0
        %251 = vmatprep.subr.mxu0 0.0
        %252 = vmatpush1.msra.mxu0 0.0
        %253 = vmatprep.subr.mxu0 0.0
        %254 = vmatpush1.msra.mxu0 0.0
        %255 = vmatprep.subr.mxu0 0.0
        %256 = vmatpush1.msra.mxu0 0.0
        %257 = vmatprep.subr.mxu0 0.0
        %258 = vmatpush1.msra.mxu0 0.0
        %259 = vmatprep.subr.mxu0 0.0
        %260 = vmatpush1.msra.mxu0 0.0
        %261 = vmatprep.subr.mxu0 0.0
        %262 = vmatpush1.msra.mxu0 0.0
        %263 = vmatprep.subr.mxu0 0.0
        %264 = vmatpush1.msra.mxu0 0.0
        %265 = vmatprep.subr.mxu0 0.0
        %266 = vmatpush1.msra.mxu0 0.0
        %267 = vmatprep.subr.mxu0 0.0
        %268 = vmatpush1.msra.mxu0 0.0
        %269 = vmatprep.subr.mxu0 0.0
        %270 = vmatpush1.msra.mxu0 0.0
        %271 = vmatprep.subr.mxu0 0.0
        %272 = vmatpush1.msra.mxu0 %v212
        %273 = vmatprep.subr.mxu0 0.0
        %274 = vmatpush1.msra.mxu0 %v211
        %275 = vmatprep.subr.mxu0 0.0
        %276 = vmatpush1.msra.mxu0 %v210
        %277 = vmatprep.subr.mxu0 0.0
        %278 = vmatpush1.msra.mxu0 %v209
        %279 = vmatprep.subr.mxu0 0.0
        %280 = vmatpush2.msra.mxu0 0.0
        %281 = vmatprep.subr.mxu0 0.0
        %282 = vmatpush2.msra.mxu0 0.0
        %283 = vmatprep.subr.mxu0 0.0
        %284 = vmatpush2.msra.mxu0 0.0
        %285 = vmatprep.subr.mxu0 0.0
        %286 = vmatpush2.msra.mxu0 0.0
        %287 = vmatprep.subr.mxu0 0.0
        %288 = vmatpush2.msra.mxu0 0.0
        %289 = vmatprep.subr.mxu0 0.0
        %290 = vmatpush2.msra.mxu0 0.0
        %291 = vmatprep.subr.mxu0 0.0
        %292 = vmatpush2.msra.mxu0 0.0
        %293 = vmatprep.subr.mxu0 0.0
        %294 = vmatpush2.msra.mxu0 0.0
        %295 = vmatprep.subr.mxu0 0.0
        %296 = vmatpush2.msra.mxu0 0.0
        %297 = vmatprep.subr.mxu0 0.0
        %298 = vmatpush2.msra.mxu0 0.0
        %299 = vmatprep.subr.mxu0 0.0
        %300 = vmatpush2.msra.mxu0 0.0
        %301 = vmatprep.subr.mxu0 0.0
        %302 = vmatpush2.msra.mxu0 0.0
        %303 = vmatprep.subr.mxu0 0.0
        %304 = vmatpush2.msra.mxu0 0.0
        %305 = vmatprep.subr.mxu0 0.0
        %306 = vmatpush2.msra.mxu0 0.0
        %307 = vmatprep.subr.mxu0 0.0
        %308 = vmatpush2.msra.mxu0 0.0
        %309 = vmatprep.subr.mxu0 0.0
        %310 = vmatpush2.msra.mxu0 0.0
        %311 = vmatprep.mubr.f32.mxu0 0.0
        %312 = vmatmul.mubr.f32.gmra.mxu0 %v245
        %v313 = vpop.f32.mrf.mxu0
        %v314 = vadd.f32 0.0, %v313
        %v315 = vpop.f32.mrf.mxu0
        %316 = vdwg.mxu0
        %v317 = vmax.f32 %v314, 0.0
        %v318 = vld [vmem:[%s2] sm:$0xf]
        %vm319 = vcmask 31744
        %v321 = vsel %vm319, %v317, 0
        %vm323 = vcmask 1043456
        %v325 = vsel %vm323, %v318, 0
        %327 = vmatprep.subr.mxu0 0.0
        %328 = vmatpush1.msra.mxu0 0.0
        %329 = vmatprep.subr.mxu0 0.0
        %330 = vmatpush1.msra.mxu0 0.0
        %331 = vmatprep.subr.mxu0 0.0
        %332 = vmatpush1.msra.mxu0 0.0
        %333 = vmatprep.subr.mxu0 0.0
        %334 = vmatpush1.msra.mxu0 0.0
        %335 = vmatprep.subr.mxu0 0.0
        %336 = vmatpush1.msra.mxu0 0.0
        %337 = vmatprep.subr.mxu0 0.0
        %338 = vmatpush1.msra.mxu0 0.0
        %339 = vmatprep.subr.mxu0 0.0
        %340 = vmatpush1.msra.mxu0 0.0
        %341 = vmatprep.subr.mxu0 0.0
        %342 = vmatpush1.msra.mxu0 0.0
        %343 = vmatprep.subr.mxu0 0.0
        %344 = vmatpush1.msra.mxu0 0.0
        %345 = vmatprep.subr.mxu0 0.0
        %346 = vmatpush1.msra.mxu0 0.0
        %347 = vmatprep.subr.mxu0 0.0
        %348 = vmatpush1.msra.mxu0 0.0
        %349 = vmatprep.subr.mxu0 0.0
        %350 = vmatpush1.msra.mxu0 0.0
        %351 = vmatprep.subr.mxu0 0.0
        %352 = vmatpush1.msra.mxu0 0.0
        %353 = vmatprep.subr.mxu0 0.0
        %354 = vmatpush1.msra.mxu0 0.0
        %355 = vmatprep.subr.mxu0 0.0
        %356 = vmatpush1.msra.mxu0 0.0
        %357 = vmatprep.subr.mxu0 0.0
        %358 = vmatpush1.msra.mxu0 %v325
        %359 = vmatprep.subr.mxu0 0.0
        %360 = vmatpush2.msra.mxu0 0.0
        %361 = vmatprep.subr.mxu0 0.0
        %362 = vmatpush2.msra.mxu0 0.0
        %363 = vmatprep.subr.mxu0 0.0
        %364 = vmatpush2.msra.mxu0 0.0
        %365 = vmatprep.subr.mxu0 0.0
        %366 = vmatpush2.msra.mxu0 0.0
        %367 = vmatprep.subr.mxu0 0.0
        %368 = vmatpush2.msra.mxu0 0.0
        %369 = vmatprep.subr.mxu0 0.0
        %370 = vmatpush2.msra.mxu0 0.0
        %371 = vmatprep.subr.mxu0 0.0
        %372 = vmatpush2.msra.mxu0 0.0
        %373 = vmatprep.subr.mxu0 0.0
        %374 = vmatpush2.msra.mxu0 0.0
        %375 = vmatprep.subr.mxu0 0.0
        %376 = vmatpush2.msra.mxu0 0.0
        %377 = vmatprep.subr.mxu0 0.0
        %378 = vmatpush2.msra.mxu0 0.0
        %379 = vmatprep.subr.mxu0 0.0
        %380 = vmatpush2.msra.mxu0 0.0
        %381 = vmatprep.subr.mxu0 0.0
        %382 = vmatpush2.msra.mxu0 0.0
        %383 = vmatprep.subr.mxu0 0.0
        %384 = vmatpush2.msra.mxu0 0.0
        %385 = vmatprep.subr.mxu0 0.0
        %386 = vmatpush2.msra.mxu0 0.0
        %387 = vmatprep.subr.mxu0 0.0
        %388 = vmatpush2.msra.mxu0 0.0
        %389 = vmatprep.subr.mxu0 0.0
        %390 = vmatpush2.msra.mxu0 0.0
        %391 = vmatprep.mubr.f32.mxu0 0.0
        %392 = vmatmul.mubr.f32.gmra.mxu0 %v321
        %v393 = vpop.f32.mrf.mxu0
        %v394 = vadd.f32 0.0, %v393
        %v395 = vpop.f32.mrf.mxu0
        %396 = vdwg.mxu0
        %v397 = vxor.u32 %v394, 2147483648
        %v398 = vmul.f32 %v397, 1.442695
        %v399 = vpow.pop %v398
        %v400 = vadd.f32 %v399, 1.0
        %v401 = vrcp.pop %v400
        %v402 = vmul.f32 1.0, %v401
        %v403 = vlaneseq
        %v404 = vshrl.u32 %v403, 7
        %v405 = vsub.s32 0, %v404
        %v406 = vrot.slane %v402, %v405
        %408 = vbcast.lane.b32.xlu0 %v406, 256
        %v409 = vpop.permute.xlu0 %408
        %s411 = sor.u32 256, 8
        %412 = vbcast.lane.b32.xlu0 %v406, %s411
        %v413 = vpop.permute.xlu0 %412
        %s415 = sor.u32 256, 16
        %416 = vbcast.lane.b32.xlu0 %v406, %s415
        %v417 = vpop.permute.xlu0 %416
        %s419 = sor.u32 256, 24
        %420 = vbcast.lane.b32.xlu0 %v406, %s419
        %v421 = vpop.permute.xlu0 %420
        %v422 = vmul.f32 %v189, %v409
        %v423 = vmul.f32 %v190, %v409
        %v424 = vmul.f32 %v191, %v413
        %v425 = vmul.f32 %v192, %v413
        %v426 = vmul.f32 %v193, %v417
        %v427 = vmul.f32 %v194, %v417
        %v428 = vmul.f32 %v195, %v421
        %v429 = vmul.f32 %v196, %v421
        %430 = vst [vmem:[%s188] sm:$0xff] %v422
        %431 = vst [vmem:[%s188 + $0x8] sm:$0xff] %v423
        %432 = vst [vmem:[%s188 + $0x10] sm:$0xff] %v424
        %433 = vst [vmem:[%s188 + $0x18] sm:$0xff] %v425
        %434 = vst [vmem:[%s188 + $0x20] sm:$0xff] %v426
        %435 = vst [vmem:[%s188 + $0x28] sm:$0xff] %v427
        %436 = vst [vmem:[%s188 + $0x30] sm:$0xff] %v428
        %437 = vst [vmem:[%s188 + $0x38] sm:$0xff] %v429
        %s438 = sand.u32 %s96, 1
        %s439 = scalar_lea.sflag [#allocation4], %s438
        %s440 = sand.u32 %s96, 1
        %s441 = smul.addr %s440, 64
        %s442 = scalar_lea.vmem [#allocation5], %s441
        // Predicated region
        $region37: #{tpu_custom_call.1} parent=31 // pred_check
          %p443 = pneg %p106
        $region38: #{tpu_custom_call.1} parent=31 // pred_check_branch
          %445 = sbr.rel (%p443) target = $region40
        $region39: #{tpu_custom_call.1} parent=31 // pred_region
          %s447 = ssub.s32 1024, 1024
          %448 = vsyncadd %s439, %s447
          %s449 = smul.addr %s20, 8
          %s450 = smul.addr %s449, 128
          %s451 = scalar_lea.hbm %s3, %s450
          %s452 = sshll.u32 %s442, 4
          %s453 = int_to_ptr.vmem [resolvable:$true] %s452
          %458 = dma.vmem_to_hbm [thread:$0]  %s453, 1024, %s451, %s439, 256, 256, 16
        $region40: #{tpu_custom_call.1} parent=31 // pred_fallthru
          _
      $region32: #{tpu_custom_call.1} parent=5 // pred_fallthru
        _
      %p459 = scmp.le.s32.totalorder 2, %s15
      // Predicated region
      $region41: #{tpu_custom_call.1} parent=5 // pred_check
        %p460 = pneg %p459
      $region42: #{tpu_custom_call.1} parent=5 // pred_check_branch
        %462 = sbr.rel (%p460) target = $region44
      $region43: #{tpu_custom_call.1} parent=5 // pred_region
        %s463 = ssub.s32 %s15, 2
        // Predicated region
        $region45: #{tpu_custom_call.1} parent=43 // pred_check
          %p464 = pneg %p112
        $region46: #{tpu_custom_call.1} parent=43 // pred_check_branch
          %466 = sbr.rel (%p464) target = $region48
        $region47: #{tpu_custom_call.1} parent=43 // pred_region
          %s467 = sand.u32 %s97, 1
          %s468 = scalar_lea.sflag [#allocation4], %s467
          %s469 = sand.u32 %s97, 1
          %s470 = smul.addr %s469, 64
          %s471 = scalar_lea.vmem [#allocation5], %s470
          %472 = dma.done %s468, 1024
        $region48: #{tpu_custom_call.1} parent=43 // pred_fallthru
          _
      $region44: #{tpu_custom_call.1} parent=5 // pred_fallthru
        _
    $region6: #{tpu_custom_call.1} parent=1 // loop_footer
      %s19 = sadd.s32 1, %s15
    $region7: #{tpu_custom_call.1} parent=1 // loop_footer_branch
      %14 = sbr.rel target = $region3
    $region8: #{tpu_custom_call.1} parent=1 // loop_exit
      _
    %473 = vsyncpa [#allocation3], 1
    %s474 = scalar_lea.sflag [#allocation3], 1
    %475 = vsyncpa %s474, 1
    %476 = vsyncpa [#allocation4], 1
    %s477 = scalar_lea.sflag [#allocation4], 1
    %478 = vsyncpa %s477, 1

</llo_original>
